<compile_context>
chip_gen: v6e
topology: v6e:2x2x1
jax: 0.10.0
libtpu: 0.0.40
codegen_flags: <defaults>
</compile_context>

<pallas_src>
import functools

import jax
import jax.numpy as jnp
from jax import lax
from jax.experimental import pallas as pl
from jax.experimental.pallas import tpu as pltpu


# Budget for the 4 pipelined buffers (2 in + 2 out), counted at f32 width so
# bf16 inputs leave room for f32 intermediates.  24 MiB total => ~6 MiB/block,
# which keeps per-grid-step overhead (~0.35 us) negligible while fitting well
# inside v7x's 64 MiB physical VMEM.
_VMEM_BUDGET_BYTES = 24 * 1024 * 1024
_VMEM_LIMIT_BYTES = 48 * 1024 * 1024   # raised scoped limit, headroom below 64 MiB


def _pick_tile(full: int, other_elems: int, itemsize: int, align: int) -> int:
    """Largest tile along `full`, multiple of `align`, fitting the VMEM budget."""
    bytes_per_elem = max(itemsize, 4)  # account intermediates at f32 width
    max_by_vmem = _VMEM_BUDGET_BYTES // (4 * max(other_elems, 1) * bytes_per_elem)
    tile = min(full, max_by_vmem)
    if tile >= full:
        return full
    return max(align, (tile // align) * align)


def _normalize_lane_kernel(x_ref, o_ref, *, power: float):
    # x_ref: (tile_rows, C) block; reduce over the last (lane) axis.
    x = x_ref[...].astype(jnp.float32)
    if power == 2:
        s = jnp.sum(x * x, axis=-1, keepdims=True)
        o_ref[...] = (x * lax.rsqrt(s)).astype(o_ref.dtype)
    else:
        # Literal PyTorch semantics: x**p (no abs), exact divide.
        s = jnp.sum(jnp.power(x, power), axis=-1, keepdims=True)
        norm = jnp.power(s, 1.0 / power)
        o_ref[...] = (x / norm).astype(o_ref.dtype)


def _normalize_sublane_kernel(x_ref, o_ref, *, power: float):
    # x_ref: (tile_b, C, tile_hw) block; reduce over the channel (sublane) axis.
    # Axis 0 is batch, so the reduction never mixes batch rows.
    x = x_ref[...].astype(jnp.float32)
    if power == 2:
        s = jnp.sum(x * x, axis=1, keepdims=True)
        o_ref[...] = (x * lax.rsqrt(s)).astype(o_ref.dtype)
    else:
        s = jnp.sum(jnp.power(x, power), axis=1, keepdims=True)
        norm = jnp.power(s, 1.0 / power)
        o_ref[...] = (x / norm).astype(o_ref.dtype)


def _normalize_lane(x2d: jax.Array, power) -> jax.Array:
    """p-normalize each row of (N, C); reduction over the last (lane) axis."""
    n, c = x2d.shape
    tile_rows = _pick_tile(n, c, x2d.dtype.itemsize, align=8)
    grid = (pl.cdiv(n, tile_rows),)
    return pl.pallas_call(
        functools.partial(_normalize_lane_kernel, power=power),
        out_shape=jax.ShapeDtypeStruct((n, c), x2d.dtype),
        grid_spec=pltpu.PrefetchScalarGridSpec(
            num_scalar_prefetch=0,
            grid=grid,
            in_specs=[pl.BlockSpec((tile_rows, c), lambda i: (i, 0))],
            out_specs=pl.BlockSpec((tile_rows, c), lambda i: (i, 0)),
        ),
        compiler_params=pltpu.CompilerParams(
            dimension_semantics=("parallel",),
            vmem_limit_bytes=_VMEM_LIMIT_BYTES,
        ),
    )(x2d)


def _normalize_sublane(x3d: jax.Array, power) -> jax.Array:
    """p-normalize over axis 1 of (B, C, HW); HW stays on the lane axis."""
    b, c, hw = x3d.shape
    itemsize = x3d.dtype.itemsize
    tile_hw = _pick_tile(hw, c, itemsize, align=128)
    if tile_hw >= hw:
        # Whole spatial slab fits: fold several batch rows into one block so
        # each grid step moves a meaningful amount of data.
        tile_hw = hw
        tile_b = max(1, _pick_tile(b, c * hw, itemsize, align=1))
    else:
        tile_b = 1
    grid = (pl.cdiv(b, tile_b), pl.cdiv(hw, tile_hw))
    return pl.pallas_call(
        functools.partial(_normalize_sublane_kernel, power=power),
        out_shape=jax.ShapeDtypeStruct((b, c, hw), x3d.dtype),
        grid_spec=pltpu.PrefetchScalarGridSpec(
            num_scalar_prefetch=0,
            grid=grid,
            in_specs=[pl.BlockSpec((tile_b, c, tile_hw), lambda bi, i: (bi, 0, i))],
            out_specs=pl.BlockSpec((tile_b, c, tile_hw), lambda bi, i: (bi, 0, i)),
        ),
        compiler_params=pltpu.CompilerParams(
            dimension_semantics=("parallel", "parallel"),
            vmem_limit_bytes=_VMEM_LIMIT_BYTES,
        ),
    )(x3d)


def normalize(x: jax.Array, power=2) -> jax.Array:
    """Matches PyTorch Normalize.forward: reduce over dim 1, broadcast divide."""
    if x.ndim < 2:
        raise ValueError(f"Normalize requires rank >= 2, got {x.ndim}")
    if x.ndim == 2:
        # (B, C): reduction axis is already the last (lane) axis.
        return _normalize_lane(x, power)
    # Rank >= 3 (e.g. NCHW): flatten trailing dims onto the lane axis -- free,
    # contiguous reshape, no transpose, no extra HBM passes.
    b, c = x.shape[0], x.shape[1]
    rest = 1
    for d in x.shape[2:]:
        rest *= d
    y3 = _normalize_sublane(x.reshape(b, c, rest), power)
    return y3.reshape(x.shape)


def _reference(x, power=2.0):
    norm = jnp.power(jnp.sum(jnp.power(x, power), axis=1, keepdims=True), 1.0 / power)
    return x / norm


if __name__ == "__main__":
    key = jax.random.PRNGKey(0)
    k1, k2 = jax.random.split(key)

    # 4D NCHW input (conv feature map), B=2, C=4, H=W=16.
    x4 = jax.random.normal(k1, (2, 4, 16, 16), dtype=jnp.float32)
    y4 = jax.block_until_ready(normalize(x4, power=2))
    ref4 = _reference(x4, 2.0)
    assert y4.shape == x4.shape and y4.dtype == x4.dtype
    assert jnp.allclose(y4, ref4, atol=1e-5, rtol=1e-5)

    # 2D (B, D) input, the common contrastive-learning usage.
    x2 = jax.random.normal(k2, (8, 32), dtype=jnp.float32)
    y2 = jax.block_until_ready(normalize(x2, power=2))
    ref2 = _reference(x2, 2.0)
    assert y2.shape == x2.shape
    assert jnp.allclose(y2, ref2, atol=1e-5, rtol=1e-5)

    print("KERNEL_OK")
</pallas_src>

<mosaic_0001>
module attributes {stable_mosaic.version = 11 : i64} {
  func.func @_normalize_sublane_kernel(%arg0: i32, %arg1: i32, %arg2: memref<2x4x256xf32, #tpu.memory_space<vmem>>, %arg3: memref<2x4x256xf32, #tpu.memory_space<vmem>>) attributes {dimension_semantics = [#tpu.dimension_semantics<parallel>, #tpu.dimension_semantics<parallel>], iteration_bounds = array<i64: 1, 1>, scalar_prefetch = 0 : i64, scratch_operands = 0 : i64, tpu.core_type = #tpu.core_type<tc>, window_params = [{transform_indices = @transform_0, window_bounds = array<i64: 2, 4, 256>}, {transform_indices = @transform_1, window_bounds = array<i64: 2, 4, 256>}]} {
    %c0 = arith.constant 0 : index
    %c0_0 = arith.constant 0 : index
    %c0_1 = arith.constant 0 : index
    %0 = vector.load %arg2[%c0, %c0_0, %c0_1] : memref<2x4x256xf32, #tpu.memory_space<vmem>>, vector<2x4x256xf32>
    %1 = arith.mulf %0, %0 : vector<2x4x256xf32>
    %cst = arith.constant dense<0.000000e+00> : vector<2x256xf32>
    %2 = vector.multi_reduction <add>, %1, %cst [1] : vector<2x4x256xf32> to vector<2x256xf32>
    %3 = vector.shape_cast %2 : vector<2x256xf32> to vector<2x1x256xf32>
    %4 = math.rsqrt %3 : vector<2x1x256xf32>
    %5 = vector.broadcast %4 : vector<2x1x256xf32> to vector<2x4x256xf32>
    %6 = arith.mulf %0, %5 : vector<2x4x256xf32>
    %c0_2 = arith.constant 0 : index
    %c0_3 = arith.constant 0 : index
    %c0_4 = arith.constant 0 : index
    %7 = vector.load %arg3[%c0_2, %c0_3, %c0_4] : memref<2x4x256xf32, #tpu.memory_space<vmem>>, vector<2x4x256xf32>
    tpu.vector_store %arg3[%c0_2, %c0_3, %c0_4], %6 {strides = array<i32>} : memref<2x4x256xf32, #tpu.memory_space<vmem>>, vector<2x4x256xf32>,
    return
  }
  func.func @transform_0(%arg0: i32, %arg1: i32) -> (i32, i32, i32) {
    %c0_i32 = arith.constant 0 : i32
    %c0_i32_0 = arith.constant 0 : i32
    return %arg0, %c0_i32, %arg1 : i32, i32, i32
  }
  func.func @transform_1(%arg0: i32, %arg1: i32) -> (i32, i32, i32) {
    %c0_i32 = arith.constant 0 : i32
    %c0_i32_0 = arith.constant 0 : i32
    return %arg0, %c0_i32, %arg1 : i32, i32, i32
  }
}

</mosaic_0001>

<llo_original>
// kernel: tpu_custom_call.1
$region0: #{tpu_custom_call.1}
  #allocation0 [shape = 'u32[]', space=smem, size = 0x4, offset = 0x4, fixed_abs, tag = 'smem constant byte address 0x4 - core index']
  #allocation1 [shape = 'u32[144,128]{1,0:T(1,128)}', space=vmem, size = 0x12000, scoped, tag = 'internal scratch']
  %s0 = inlined_call_operand.hbm [shape: f32[2,4,256], index: 0, kind: input, shape index: {}]
  %s1 = inlined_call_operand.hbm [shape: f32[2,4,256], index: 1, kind: output, shape index: {}]
  %s2 = sld [smem:[#allocation0]]
  $region18: #{tpu_custom_call.1} parent=0
    _
  %s4 = ssub.s32 1, %s2
  %s5 = scalar_select 0, %s4, %s2
  $region1: #{tpu_custom_call.1} parent=0
    #allocation2 [shape = 'u8[8192]{0}', space=vmem, size = 0x2000, scoped, tag = 'input window, operand 0, single buffered']
    #allocation3 [shape = 's32[1]{0}', space=sflag, size = 0x4, scoped, tag = 'scoped memory for tpu_custom_call.1']
    #allocation4 [shape = 's32[1]{0}', space=sflag, size = 0x4, scoped, tag = 'scoped memory for tpu_custom_call.1']
    #allocation5 [shape = 'u8[8192]{0}', space=vmem, size = 0x2000, scoped, tag = 'output window, operand 0, single buffered']
    %6 = vsyncpa [#allocation3], 0
    %7 = vsyncpa [#allocation4], 0
    // Predicated region
    $region2: #{tpu_custom_call.1} parent=1 // pred_check
      _
    $region3: #{tpu_custom_call.1} parent=1 // pred_check_branch
      %9 = sbr.rel (0) target = $region5
    $region4: #{tpu_custom_call.1} parent=1 // pred_region
      %s11 = ssub.s32 256, 256
      %12 = vsyncadd [#allocation3], %s11
      %s13 = sshll.u32 [#allocation2], 4
      %s14 = int_to_ptr.vmem [resolvable:$true] %s13
      %19 = dma.hbm_to_vmem [thread:$0]  %s0, 256, %s14, [#allocation3], 128, 128, 8
    $region5: #{tpu_custom_call.1} parent=1 // pred_fallthru
      _
    // Predicated region
    $region6: #{tpu_custom_call.1} parent=1 // pred_check
      _
    $region7: #{tpu_custom_call.1} parent=1 // pred_check_branch
      %21 = sbr.rel (0) target = $region9
    $region8: #{tpu_custom_call.1} parent=1 // pred_region
      %22 = dma.done [#allocation3], 256
    $region9: #{tpu_custom_call.1} parent=1 // pred_fallthru
      _
    %v23 = vld [vmem:[#allocation2] sm:$0xff]
    %v24 = vld [vmem:[#allocation2 + $0x8] sm:$0xff]
    %v25 = vmul.f32 %v23, %v23
    %v26 = vmul.f32 %v24, %v24
    %v29 = vcombine.high %v25, %v25
    %v30 = vcombine.high %v26, %v26
    %vm33 = vcmask 1043456
    %v34 = vsel %vm33, %v25, 0.0
    %v35 = vrot.slane %v34, 4
    %v36 = vadd.f32 %v34, %v35
    %v37 = vrot.slane %v36, 2
    %v38 = vadd.f32 %v36, %v37
    %v39 = vrot.slane %v38, 1
    %v40 = vadd.f32 %v38, %v39
    %v41 = vsel %vm33, %v29, 0.0
    %v42 = vrot.slane %v41, 4
    %v43 = vadd.f32 %v41, %v42
    %v44 = vrot.slane %v43, 2
    %v45 = vadd.f32 %v43, %v44
    %v46 = vrot.slane %v45, 1
    %v47 = vadd.f32 %v45, %v46
    %v48 = vsel %vm33, %v26, 0.0
    %v49 = vrot.slane %v48, 4
    %v50 = vadd.f32 %v48, %v49
    %v51 = vrot.slane %v50, 2
    %v52 = vadd.f32 %v50, %v51
    %v53 = vrot.slane %v52, 1
    %v54 = vadd.f32 %v52, %v53
    %v55 = vsel %vm33, %v30, 0.0
    %v56 = vrot.slane %v55, 4
    %v57 = vadd.f32 %v55, %v56
    %v58 = vrot.slane %v57, 2
    %v59 = vadd.f32 %v57, %v58
    %v60 = vrot.slane %v59, 1
    %v61 = vadd.f32 %v59, %v60
    %v62 = vrsqrt.pop %v40
    %v63 = vrsqrt.pop %v47
    %v64 = vrsqrt.pop %v54
    %v65 = vrsqrt.pop %v61
    %v70 = vcombine.low %v62, %v63
    %v71 = vcombine.low %v64, %v65
    %v74 = vmul.f32 %v23, %v70
    %v75 = vmul.f32 %v24, %v71
    %76 = vst [vmem:[#allocation5] sm:$0xff] %v74
    %77 = vst [vmem:[#allocation5 + $0x8] sm:$0xff] %v75
    // Predicated region
    $region10: #{tpu_custom_call.1} parent=1 // pred_check
      _
    $region11: #{tpu_custom_call.1} parent=1 // pred_check_branch
      %79 = sbr.rel (0) target = $region13
    $region12: #{tpu_custom_call.1} parent=1 // pred_region
      %s81 = ssub.s32 256, 256
      %82 = vsyncadd [#allocation4], %s81
      %s83 = sshll.u32 [#allocation5], 4
      %s84 = int_to_ptr.vmem [resolvable:$true] %s83
      %89 = dma.vmem_to_hbm [thread:$0]  %s84, 256, %s1, [#allocation4], 128, 128, 8
    $region13: #{tpu_custom_call.1} parent=1 // pred_fallthru
      _
    // Predicated region
    $region14: #{tpu_custom_call.1} parent=1 // pred_check
      _
    $region15: #{tpu_custom_call.1} parent=1 // pred_check_branch
      %91 = sbr.rel (0) target = $region17
    $region16: #{tpu_custom_call.1} parent=1 // pred_region
      %92 = dma.done [#allocation4], 256
    $region17: #{tpu_custom_call.1} parent=1 // pred_fallthru
      _
    %93 = vsyncpa [#allocation3], 1
    %94 = vsyncpa [#allocation4], 1

</llo_original>
